<compile_context>
chip_gen: v6e
topology: v6e:2x2x1
jax: 0.10.0
libtpu: 0.0.40
codegen_flags: <defaults>
</compile_context>

<pallas_src>
import functools

import jax
import jax.numpy as jnp
from jax.experimental import pallas as pl
from jax.experimental.pallas import tpu as pltpu

_LANE = 128      # vreg lane width / MXU column granularity
_SUBLANE = 8     # f32 sublane granularity


def _round_up(x, m):
    return (x + m - 1) // m * m


def _mlp_fused_kernel(x_ref, *args, num_layers):
    """One batch tile of the whole MLP.

    args = (w0, b0, w1, b1, ..., w_{L-1}, b_{L-1}, o_ref).
    Weights are bf16 (K_pad, N_pad); biases are f32 (1, N_pad).
    Intermediate activations live as values (vregs / VMEM), never HBM.
    """
    o_ref = args[-1]
    wb = args[:-1]
    # bf16 matmul inputs, f32 accumulation on the MXU.
    h = x_ref[...].astype(jnp.bfloat16)
    for i in range(num_layers):
        w = wb[2 * i][...]
        b = wb[2 * i + 1][...]
        y = jnp.dot(h, w, preferred_element_type=jnp.float32) + b   # f32 epilogue
        if i < num_layers - 1:
            h = jnp.maximum(y, 0.0).astype(jnp.bfloat16)            # ReLU in f32, then cast
        else:
            o_ref[...] = y.astype(o_ref.dtype)                      # lane-dense (N_pad=128k) store


def init_mlp_params(key, in_feats, layer_szs, num_classes):
    """Deterministic init matching nn.Linear shapes (weight: (out,in), bias: (out,)).

    Weights are returned pre-transposed as (in, out) float32 at logical sizes.
    """
    params = []
    fan_in = in_feats
    sizes = list(layer_szs) + [num_classes]
    for out_feats in sizes:
        key, kw, kb = jax.random.split(key, 3)
        bound = 1.0 / jnp.sqrt(jnp.float32(fan_in))
        w_t = jax.random.uniform(kw, (fan_in, out_feats), jnp.float32,
                                 minval=-bound, maxval=bound)
        b = jax.random.uniform(kb, (out_feats,), jnp.float32,
                               minval=-bound, maxval=bound)
        params.append((w_t, b))
        fan_in = out_feats
    return params


def prepare_params(params):
    """One-time prep: zero-pad feature dims to 128 multiples, cast weights bf16."""
    prepped = []
    for w_t, b in params:
        k, n = w_t.shape
        k_pad, n_pad = _round_up(k, _LANE), _round_up(n, _LANE)
        w_pad = jnp.zeros((k_pad, n_pad), jnp.bfloat16)
        w_pad = w_pad.at[:k, :n].set(w_t.astype(jnp.bfloat16))
        b_pad = jnp.zeros((1, n_pad), jnp.float32).at[0, :n].set(b)
        prepped.append((w_pad, b_pad))
    return prepped


def mlp_forward(x, prepped_params, num_classes, *, max_tile_m=512):
    """x: (B, C, H, W) -> logits (B, num_classes). Single fused pallas_call."""
    B = x.shape[0]
    h = x.reshape(B, -1).astype(jnp.float32)          # torch.flatten(x, 1)
    K = h.shape[1]

    K_pad = prepped_params[0][0].shape[0]
    N_pad = prepped_params[-1][0].shape[1]
    assert K_pad >= K

    # Batch tiling: pad to sublane multiple; cap tile so double-buffered
    # (tile_m, K_pad) f32 x-tiles stay well inside scoped VMEM (v7x-safe).
    tile_m = min(max_tile_m, _round_up(B, _SUBLANE))
    M_pad = _round_up(B, tile_m)

    x_pad = jnp.zeros((M_pad, K_pad), jnp.float32).at[:B, :K].set(h)

    num_layers = len(prepped_params)
    flat_wb = []
    in_specs = [pl.BlockSpec((tile_m, K_pad), lambda i: (i, 0))]
    for w, b in prepped_params:
        flat_wb += [w, b]
        # Constant index_map -> weights/bias DMA'd once, VMEM-resident across the grid.
        in_specs.append(pl.BlockSpec(w.shape, lambda i: (0, 0)))
        in_specs.append(pl.BlockSpec(b.shape, lambda i: (0, 0)))

    # VMEM budget: resident weights + double-buffered x/out tiles (+ headroom),
    # clamped so it stays safe on v7x's smaller physical VMEM.
    weight_bytes = sum(int(a.size) * a.dtype.itemsize for a in flat_wb)
    tile_bytes = 2 * (tile_m * K_pad * 4 + tile_m * N_pad * 4)
    vmem_limit = int(max(32 << 20, min(3 * (weight_bytes + tile_bytes), 48 << 20)))

    out = pl.pallas_call(
        functools.partial(_mlp_fused_kernel, num_layers=num_layers),
        out_shape=jax.ShapeDtypeStruct((M_pad, N_pad), jnp.float32),
        grid=(M_pad // tile_m,),
        in_specs=in_specs,
        out_specs=pl.BlockSpec((tile_m, N_pad), lambda i: (i, 0)),
        compiler_params=pltpu.CompilerParams(
            dimension_semantics=("parallel",),   # batch tiles independent -> megacore
            vmem_limit_bytes=vmem_limit),
    )(x_pad, *flat_wb)

    return out[:B, :num_classes]


def mlp_reference(x, params):
    """Pure-JAX reference with the same numerics (bf16 matmul inputs, f32 acc)."""
    B = x.shape[0]
    h = x.reshape(B, -1).astype(jnp.float32)
    for i, (w_t, b) in enumerate(params):
        y = jnp.dot(h.astype(jnp.bfloat16), w_t.astype(jnp.bfloat16),
                    preferred_element_type=jnp.float32) + b
        h = jnp.maximum(y, 0.0) if i < len(params) - 1 else y
    return h


if __name__ == "__main__":
    key = jax.random.PRNGKey(0)
    kx, kp = jax.random.split(key)

    # Small shapes: x is NCHW (2, 4, 16, 16) -> flattened features = 1024.
    B, C, H, W = 2, 4, 16, 16
    layer_szs = [32, 32]
    num_classes = 10
    in_feats = C * H * W

    x = jax.random.normal(kx, (B, C, H, W), jnp.float32)
    params = init_mlp_params(kp, in_feats, layer_szs, num_classes)
    prepped = prepare_params(params)

    out = mlp_forward(x, prepped, num_classes)
    out = jax.block_until_ready(out)

    ref = mlp_reference(x, params)
    assert out.shape == (B, num_classes), out.shape
    assert jnp.allclose(out, ref, atol=1e-3, rtol=1e-3), "mismatch vs reference"

    print("KERNEL_OK")
</pallas_src>

<mosaic_0001>
module attributes {stable_mosaic.version = 11 : i64} {
  func.func @_mlp_fused_kernel(%arg0: i32, %arg1: memref<8x1024xf32, #tpu.memory_space<vmem>>, %arg2: memref<1024x128xbf16, #tpu.memory_space<vmem>>, %arg3: memref<1x128xf32, #tpu.memory_space<vmem>>, %arg4: memref<128x128xbf16, #tpu.memory_space<vmem>>, %arg5: memref<1x128xf32, #tpu.memory_space<vmem>>, %arg6: memref<128x128xbf16, #tpu.memory_space<vmem>>, %arg7: memref<1x128xf32, #tpu.memory_space<vmem>>, %arg8: memref<8x128xf32, #tpu.memory_space<vmem>>) attributes {dimension_semantics = [#tpu.dimension_semantics<parallel>], iteration_bounds = array<i64: 1>, scalar_prefetch = 0 : i64, scratch_operands = 0 : i64, tpu.core_type = #tpu.core_type<tc>, window_params = [{transform_indices = @transform_0, window_bounds = array<i64: 8, 1024>}, {pipeline_mode = #tpu.pipeline_mode<synchronous>, transform_indices = @transform_1, window_bounds = array<i64: 1024, 128>}, {pipeline_mode = #tpu.pipeline_mode<synchronous>, transform_indices = @transform_2, window_bounds = array<i64: 1, 128>}, {pipeline_mode = #tpu.pipeline_mode<synchronous>, transform_indices = @transform_3, window_bounds = array<i64: 128, 128>}, {pipeline_mode = #tpu.pipeline_mode<synchronous>, transform_indices = @transform_4, window_bounds = array<i64: 1, 128>}, {pipeline_mode = #tpu.pipeline_mode<synchronous>, transform_indices = @transform_5, window_bounds = array<i64: 128, 128>}, {pipeline_mode = #tpu.pipeline_mode<synchronous>, transform_indices = @transform_6, window_bounds = array<i64: 1, 128>}, {transform_indices = @transform_7, window_bounds = array<i64: 8, 128>}]} {
    %c0 = arith.constant 0 : index
    %c0_0 = arith.constant 0 : index
    %0 = vector.load %arg1[%c0, %c0_0] : memref<8x1024xf32, #tpu.memory_space<vmem>>, vector<8x1024xf32>
    %1 = arith.truncf %0 : vector<8x1024xf32> to vector<8x1024xbf16>
    %c0_1 = arith.constant 0 : index
    %c0_2 = arith.constant 0 : index
    %2 = vector.load %arg2[%c0_1, %c0_2] : memref<1024x128xbf16, #tpu.memory_space<vmem>>, vector<1024x128xbf16>
    %c0_3 = arith.constant 0 : index
    %c0_4 = arith.constant 0 : index
    %3 = vector.load %arg3[%c0_3, %c0_4] : memref<1x128xf32, #tpu.memory_space<vmem>>, vector<1x128xf32>
    %cst = arith.constant dense<0.000000e+00> : vector<8x128xf32>
    %4 = tpu.matmul %1, %2, %cst {dimension_numbers = #tpu.dot_dimension_numbers<[1], [0], [0], [1], [0, 0, 1, 1], [], []>} : vector<8x1024xbf16>, vector<1024x128xbf16>, vector<8x128xf32> -> vector<8x128xf32>
    %5 = vector.broadcast %3 : vector<1x128xf32> to vector<8x128xf32>
    %6 = arith.addf %4, %5 : vector<8x128xf32>
    %cst_5 = arith.constant 0.000000e+00 : f32
    %7 = vector.broadcast %cst_5 : f32 to vector<8x128xf32>
    %8 = arith.maximumf %6, %7 : vector<8x128xf32>
    %9 = arith.truncf %8 : vector<8x128xf32> to vector<8x128xbf16>
    %c0_6 = arith.constant 0 : index
    %c0_7 = arith.constant 0 : index
    %10 = vector.load %arg4[%c0_6, %c0_7] : memref<128x128xbf16, #tpu.memory_space<vmem>>, vector<128x128xbf16>
    %c0_8 = arith.constant 0 : index
    %c0_9 = arith.constant 0 : index
    %11 = vector.load %arg5[%c0_8, %c0_9] : memref<1x128xf32, #tpu.memory_space<vmem>>, vector<1x128xf32>
    %cst_10 = arith.constant dense<0.000000e+00> : vector<8x128xf32>
    %12 = tpu.matmul %9, %10, %cst_10 {dimension_numbers = #tpu.dot_dimension_numbers<[1], [0], [0], [1], [0, 0, 1, 1], [], []>} : vector<8x128xbf16>, vector<128x128xbf16>, vector<8x128xf32> -> vector<8x128xf32>
    %13 = vector.broadcast %11 : vector<1x128xf32> to vector<8x128xf32>
    %14 = arith.addf %12, %13 : vector<8x128xf32>
    %cst_11 = arith.constant 0.000000e+00 : f32
    %15 = vector.broadcast %cst_11 : f32 to vector<8x128xf32>
    %16 = arith.maximumf %14, %15 : vector<8x128xf32>
    %17 = arith.truncf %16 : vector<8x128xf32> to vector<8x128xbf16>
    %c0_12 = arith.constant 0 : index
    %c0_13 = arith.constant 0 : index
    %18 = vector.load %arg6[%c0_12, %c0_13] : memref<128x128xbf16, #tpu.memory_space<vmem>>, vector<128x128xbf16>
    %c0_14 = arith.constant 0 : index
    %c0_15 = arith.constant 0 : index
    %19 = vector.load %arg7[%c0_14, %c0_15] : memref<1x128xf32, #tpu.memory_space<vmem>>, vector<1x128xf32>
    %cst_16 = arith.constant dense<0.000000e+00> : vector<8x128xf32>
    %20 = tpu.matmul %17, %18, %cst_16 {dimension_numbers = #tpu.dot_dimension_numbers<[1], [0], [0], [1], [0, 0, 1, 1], [], []>} : vector<8x128xbf16>, vector<128x128xbf16>, vector<8x128xf32> -> vector<8x128xf32>
    %21 = vector.broadcast %19 : vector<1x128xf32> to vector<8x128xf32>
    %22 = arith.addf %20, %21 : vector<8x128xf32>
    %c0_17 = arith.constant 0 : index
    %c0_18 = arith.constant 0 : index
    %23 = vector.load %arg8[%c0_17, %c0_18] : memref<8x128xf32, #tpu.memory_space<vmem>>, vector<8x128xf32>
    tpu.vector_store %arg8[%c0_17, %c0_18], %22 {strides = array<i32>} : memref<8x128xf32, #tpu.memory_space<vmem>>, vector<8x128xf32>,
    return
  }
  func.func @transform_0(%arg0: i32) -> (i32, i32) {
    %c0_i32 = arith.constant 0 : i32
    %c0_i32_0 = arith.constant 0 : i32
    return %arg0, %c0_i32 : i32, i32
  }
  func.func @transform_1(%arg0: i32) -> (i32, i32) {
    %c0_i32 = arith.constant 0 : i32
    %c0_i32_0 = arith.constant 0 : i32
    %c0_i32_1 = arith.constant 0 : i32
    return %c0_i32, %c0_i32_0 : i32, i32
  }
  func.func @transform_2(%arg0: i32) -> (i32, i32) {
    %c0_i32 = arith.constant 0 : i32
    %c0_i32_0 = arith.constant 0 : i32
    %c0_i32_1 = arith.constant 0 : i32
    return %c0_i32, %c0_i32_0 : i32, i32
  }
  func.func @transform_3(%arg0: i32) -> (i32, i32) {
    %c0_i32 = arith.constant 0 : i32
    %c0_i32_0 = arith.constant 0 : i32
    %c0_i32_1 = arith.constant 0 : i32
    return %c0_i32, %c0_i32_0 : i32, i32
  }
  func.func @transform_4(%arg0: i32) -> (i32, i32) {
    %c0_i32 = arith.constant 0 : i32
    %c0_i32_0 = arith.constant 0 : i32
    %c0_i32_1 = arith.constant 0 : i32
    return %c0_i32, %c0_i32_0 : i32, i32
  }
  func.func @transform_5(%arg0: i32) -> (i32, i32) {
    %c0_i32 = arith.constant 0 : i32
    %c0_i32_0 = arith.constant 0 : i32
    %c0_i32_1 = arith.constant 0 : i32
    return %c0_i32, %c0_i32_0 : i32, i32
  }
  func.func @transform_6(%arg0: i32) -> (i32, i32) {
    %c0_i32 = arith.constant 0 : i32
    %c0_i32_0 = arith.constant 0 : i32
    %c0_i32_1 = arith.constant 0 : i32
    return %c0_i32, %c0_i32_0 : i32, i32
  }
  func.func @transform_7(%arg0: i32) -> (i32, i32) {
    %c0_i32 = arith.constant 0 : i32
    %c0_i32_0 = arith.constant 0 : i32
    return %arg0, %c0_i32 : i32, i32
  }
}

</mosaic_0001>

<llo_original>
// kernel: tpu_custom_call.1
$region0: #{tpu_custom_call.1}
  #allocation0 [shape = 'u32[]', space=smem, size = 0x4, offset = 0x4, fixed_abs, tag = 'smem constant byte address 0x4 - core index']
  #allocation1 [shape = 'u32[144,128]{1,0:T(1,128)}', space=vmem, size = 0x12000, scoped, tag = 'internal scratch']
  %s0 = inlined_call_operand.hbm [shape: f32[8,1024], index: 0, kind: input, shape index: {}]
  %s1 = inlined_call_operand.hbm [shape: bf16[1024,128], index: 1, kind: input, shape index: {}]
  %s2 = inlined_call_operand.vmem [shape: f32[1,128], index: 2, kind: input, shape index: {}]
  %s3 = inlined_call_operand.hbm [shape: bf16[128,128], index: 3, kind: input, shape index: {}]
  %s4 = inlined_call_operand.vmem [shape: f32[1,128], index: 4, kind: input, shape index: {}]
  %s5 = inlined_call_operand.hbm [shape: bf16[128,128], index: 5, kind: input, shape index: {}]
  %s6 = inlined_call_operand.vmem [shape: f32[1,128], index: 6, kind: input, shape index: {}]
  %s7 = inlined_call_operand.hbm [shape: f32[8,128], index: 7, kind: output, shape index: {}]
  %s8 = sld [smem:[#allocation0]]
  $region54: #{tpu_custom_call.1} parent=0
    _
  %s10 = ssub.s32 1, %s8
  %s11 = scalar_select 0, %s10, %s8
  $region1: #{tpu_custom_call.1} parent=0
    #allocation2 [shape = 'u8[32768]{0}', space=vmem, size = 0x8000, scoped, tag = 'input window, operand 0, single buffered']
    #allocation3 [shape = 's32[1]{0}', space=sflag, size = 0x4, scoped, tag = 'scoped memory for tpu_custom_call.1']
    #allocation4 [shape = 's32[1]{0}', space=sflag, size = 0x4, scoped, tag = 'scoped memory for tpu_custom_call.1']
    #allocation5 [shape = 'u8[262144]{0}', space=vmem, size = 0x40000, scoped, tag = 'input window, operand 1, single buffered']
    #allocation6 [shape = 's32[1]{0}', space=sflag, size = 0x4, scoped, tag = 'scoped memory for tpu_custom_call.1']
    #allocation7 [shape = 'u8[32768]{0}', space=vmem, size = 0x8000, scoped, tag = 'input window, operand 3, single buffered']
    #allocation8 [shape = 'u8[32768]{0}', space=vmem, size = 0x8000, scoped, tag = 'input window, operand 5, single buffered']
    #allocation9 [shape = 's32[1]{0}', space=sflag, size = 0x4, scoped, tag = 'scoped memory for tpu_custom_call.1']
    #allocation10 [shape = 'u8[4096]{0}', space=vmem, size = 0x1000, scoped, tag = 'output window, operand 0, single buffered']
    %12 = vsyncpa [#allocation3], 0
    %13 = vsyncpa [#allocation6], 0
    %14 = vsyncpa [#allocation9], 0
    %15 = vsyncpa [#allocation4], 0
    // Predicated region
    $region2: #{tpu_custom_call.1} parent=1 // pred_check
      _
    $region3: #{tpu_custom_call.1} parent=1 // pred_check_branch
      %17 = sbr.rel (0) target = $region5
    $region4: #{tpu_custom_call.1} parent=1 // pred_region
      %s19 = ssub.s32 1024, 1024
      %20 = vsyncadd [#allocation3], %s19
      %s22 = sshll.u32 [#allocation2], 4
      %s23 = int_to_ptr.vmem [resolvable:$true] %s22
      %25 = dma.hbm_to_vmem [thread:$0]  %s0, 1024, %s23, [#allocation3]
    $region5: #{tpu_custom_call.1} parent=1 // pred_fallthru
      _
    // Predicated region
    $region6: #{tpu_custom_call.1} parent=1 // pred_check
      _
    $region7: #{tpu_custom_call.1} parent=1 // pred_check_branch
      %27 = sbr.rel (0) target = $region9
    $region8: #{tpu_custom_call.1} parent=1 // pred_region
      %s29 = ssub.s32 8192, 8192
      %30 = vsyncadd [#allocation6], %s29
      %s31 = sshll.u32 [#allocation5], 4
      %s32 = int_to_ptr.vmem [resolvable:$true] %s31
      %37 = dma.hbm_to_vmem [thread:$0]  %s1, 8192, %s32, [#allocation6], 64, 64, 4
    $region9: #{tpu_custom_call.1} parent=1 // pred_fallthru
      _
    // Predicated region
    $region10: #{tpu_custom_call.1} parent=1 // pred_check
      _
    $region11: #{tpu_custom_call.1} parent=1 // pred_check_branch
      %39 = sbr.rel (0) target = $region13
    $region12: #{tpu_custom_call.1} parent=1 // pred_region
      _
    $region13: #{tpu_custom_call.1} parent=1 // pred_fallthru
      _
    // Predicated region
    $region14: #{tpu_custom_call.1} parent=1 // pred_check
      _
    $region15: #{tpu_custom_call.1} parent=1 // pred_check_branch
      %41 = sbr.rel (0) target = $region17
    $region16: #{tpu_custom_call.1} parent=1 // pred_region
      %s43 = ssub.s32 1024, 1024
      %44 = vsyncadd [#allocation6], %s43
      %s45 = sshll.u32 [#allocation7], 4
      %s46 = int_to_ptr.vmem [resolvable:$true] %s45
      %51 = dma.hbm_to_vmem [thread:$0]  %s3, 1024, %s46, [#allocation6], 64, 64, 4
    $region17: #{tpu_custom_call.1} parent=1 // pred_fallthru
      _
    // Predicated region
    $region18: #{tpu_custom_call.1} parent=1 // pred_check
      _
    $region19: #{tpu_custom_call.1} parent=1 // pred_check_branch
      %53 = sbr.rel (0) target = $region21
    $region20: #{tpu_custom_call.1} parent=1 // pred_region
      _
    $region21: #{tpu_custom_call.1} parent=1 // pred_fallthru
      _
    // Predicated region
    $region22: #{tpu_custom_call.1} parent=1 // pred_check
      _
    $region23: #{tpu_custom_call.1} parent=1 // pred_check_branch
      %55 = sbr.rel (0) target = $region25
    $region24: #{tpu_custom_call.1} parent=1 // pred_region
      %s57 = ssub.s32 1024, 1024
      %58 = vsyncadd [#allocation9], %s57
      %s59 = sshll.u32 [#allocation8], 4
      %s60 = int_to_ptr.vmem [resolvable:$true] %s59
      %65 = dma.hbm_to_vmem [thread:$0]  %s5, 1024, %s60, [#allocation9], 64, 64, 4
    $region25: #{tpu_custom_call.1} parent=1 // pred_fallthru
      _
    // Predicated region
    $region26: #{tpu_custom_call.1} parent=1 // pred_check
      _
    $region27: #{tpu_custom_call.1} parent=1 // pred_check_branch
      %67 = sbr.rel (0) target = $region29
    $region28: #{tpu_custom_call.1} parent=1 // pred_region
      _
    $region29: #{tpu_custom_call.1} parent=1 // pred_fallthru
      _
    // Predicated region
    $region30: #{tpu_custom_call.1} parent=1 // pred_check
      _
    $region31: #{tpu_custom_call.1} parent=1 // pred_check_branch
      %69 = sbr.rel (0) target = $region33
    $region32: #{tpu_custom_call.1} parent=1 // pred_region
      %70 = dma.done [#allocation3], 1024
    $region33: #{tpu_custom_call.1} parent=1 // pred_fallthru
      _
    // Predicated region
    $region34: #{tpu_custom_call.1} parent=1 // pred_check
      _
    $region35: #{tpu_custom_call.1} parent=1 // pred_check_branch
      %72 = sbr.rel (0) target = $region37
    $region36: #{tpu_custom_call.1} parent=1 // pred_region
      %73 = dma.done [#allocation6], 8192
    $region37: #{tpu_custom_call.1} parent=1 // pred_fallthru
      _
    // Predicated region
    $region38: #{tpu_custom_call.1} parent=1 // pred_check
      _
    $region39: #{tpu_custom_call.1} parent=1 // pred_check_branch
      %75 = sbr.rel (0) target = $region41
    $region40: #{tpu_custom_call.1} parent=1 // pred_region
      %76 = dma.done [#allocation6], 1024
    $region41: #{tpu_custom_call.1} parent=1 // pred_fallthru
      _
    // Predicated region
    $region42: #{tpu_custom_call.1} parent=1 // pred_check
      _
    $region43: #{tpu_custom_call.1} parent=1 // pred_check_branch
      %78 = sbr.rel (0) target = $region45
    $region44: #{tpu_custom_call.1} parent=1 // pred_region
      %79 = dma.done [#allocation9], 1024
    $region45: #{tpu_custom_call.1} parent=1 // pred_fallthru
      _
    %v81 = vld [vmem:[#allocation2] sm:$0xff]
    %v82 = vld [vmem:[#allocation2 + $0x8] sm:$0xff]
    %v83 = vld [vmem:[#allocation2 + $0x10] sm:$0xff]
    %v84 = vld [vmem:[#allocation2 + $0x18] sm:$0xff]
    %v85 = vld [vmem:[#allocation2 + $0x20] sm:$0xff]
    %v86 = vld [vmem:[#allocation2 + $0x28] sm:$0xff]
    %v87 = vld [vmem:[#allocation2 + $0x30] sm:$0xff]
    %v88 = vld [vmem:[#allocation2 + $0x38] sm:$0xff]
    %v89 = vpack.c.bf16 %v81, %v81
    %v90 = vpack.c.bf16 %v82, %v82
    %v91 = vpack.c.bf16 %v83, %v83
    %v92 = vpack.c.bf16 %v84, %v84
    %v93 = vpack.c.bf16 %v85, %v85
    %v94 = vpack.c.bf16 %v86, %v86
    %v95 = vpack.c.bf16 %v87, %v87
    %v96 = vpack.c.bf16 %v88, %v88
    %v97 = vld [vmem:[#allocation5] sm:$0xf]
    %v98 = vld [vmem:[#allocation5 + $0x4] sm:$0xf]
    %v99 = vld [vmem:[#allocation5 + $0x8] sm:$0xf]
    %v100 = vld [vmem:[#allocation5 + $0xc] sm:$0xf]
    %v101 = vld [vmem:[#allocation5 + $0x10] sm:$0xf]
    %v102 = vld [vmem:[#allocation5 + $0x14] sm:$0xf]
    %v103 = vld [vmem:[#allocation5 + $0x18] sm:$0xf]
    %v104 = vld [vmem:[#allocation5 + $0x1c] sm:$0xf]
    %v105 = vld [vmem:[#allocation5 + $0x20] sm:$0xf]
    %v106 = vld [vmem:[#allocation5 + $0x24] sm:$0xf]
    %v107 = vld [vmem:[#allocation5 + $0x28] sm:$0xf]
    %v108 = vld [vmem:[#allocation5 + $0x2c] sm:$0xf]
    %v109 = vld [vmem:[#allocation5 + $0x30] sm:$0xf]
    %v110 = vld [vmem:[#allocation5 + $0x34] sm:$0xf]
    %v111 = vld [vmem:[#allocation5 + $0x38] sm:$0xf]
    %v112 = vld [vmem:[#allocation5 + $0x3c] sm:$0xf]
    %v113 = vld [vmem:[#allocation5 + $0x40] sm:$0xf]
    %v114 = vld [vmem:[#allocation5 + $0x44] sm:$0xf]
    %v115 = vld [vmem:[#allocation5 + $0x48] sm:$0xf]
    %v116 = vld [vmem:[#allocation5 + $0x4c] sm:$0xf]
    %v117 = vld [vmem:[#allocation5 + $0x50] sm:$0xf]
    %v118 = vld [vmem:[#allocation5 + $0x54] sm:$0xf]
    %v119 = vld [vmem:[#allocation5 + $0x58] sm:$0xf]
    %v120 = vld [vmem:[#allocation5 + $0x5c] sm:$0xf]
    %v121 = vld [vmem:[#allocation5 + $0x60] sm:$0xf]
    %v122 = vld [vmem:[#allocation5 + $0x64] sm:$0xf]
    %v123 = vld [vmem:[#allocation5 + $0x68] sm:$0xf]
    %v124 = vld [vmem:[#allocation5 + $0x6c] sm:$0xf]
    %v125 = vld [vmem:[#allocation5 + $0x70] sm:$0xf]
    %v126 = vld [vmem:[#allocation5 + $0x74] sm:$0xf]
    %v127 = vld [vmem:[#allocation5 + $0x78] sm:$0xf]
    %v128 = vld [vmem:[#allocation5 + $0x7c] sm:$0xf]
    %v129 = vld [vmem:[#allocation5 + $0x80] sm:$0xf]
    %v130 = vld [vmem:[#allocation5 + $0x84] sm:$0xf]
    %v131 = vld [vmem:[#allocation5 + $0x88] sm:$0xf]
    %v132 = vld [vmem:[#allocation5 + $0x8c] sm:$0xf]
    %v133 = vld [vmem:[#allocation5 + $0x90] sm:$0xf]
    %v134 = vld [vmem:[#allocation5 + $0x94] sm:$0xf]
    %v135 = vld [vmem:[#allocation5 + $0x98] sm:$0xf]
    %v136 = vld [vmem:[#allocation5 + $0x9c] sm:$0xf]
    %v137 = vld [vmem:[#allocation5 + $0xa0] sm:$0xf]
    %v138 = vld [vmem:[#allocation5 + $0xa4] sm:$0xf]
    %v139 = vld [vmem:[#allocation5 + $0xa8] sm:$0xf]
    %v140 = vld [vmem:[#allocation5 + $0xac] sm:$0xf]
    %v141 = vld [vmem:[#allocation5 + $0xb0] sm:$0xf]
    %v142 = vld [vmem:[#allocation5 + $0xb4] sm:$0xf]
    %v143 = vld [vmem:[#allocation5 + $0xb8] sm:$0xf]
    %v144 = vld [vmem:[#allocation5 + $0xbc] sm:$0xf]
    %v145 = vld [vmem:[#allocation5 + $0xc0] sm:$0xf]
    %v146 = vld [vmem:[#allocation5 + $0xc4] sm:$0xf]
    %v147 = vld [vmem:[#allocation5 + $0xc8] sm:$0xf]
    %v148 = vld [vmem:[#allocation5 + $0xcc] sm:$0xf]
    %v149 = vld [vmem:[#allocation5 + $0xd0] sm:$0xf]
    %v150 = vld [vmem:[#allocation5 + $0xd4] sm:$0xf]
    %v151 = vld [vmem:[#allocation5 + $0xd8] sm:$0xf]
    %v152 = vld [vmem:[#allocation5 + $0xdc] sm:$0xf]
    %v153 = vld [vmem:[#allocation5 + $0xe0] sm:$0xf]
    %v154 = vld [vmem:[#allocation5 + $0xe4] sm:$0xf]
    %v155 = vld [vmem:[#allocation5 + $0xe8] sm:$0xf]
    %v156 = vld [vmem:[#allocation5 + $0xec] sm:$0xf]
    %v157 = vld [vmem:[#allocation5 + $0xf0] sm:$0xf]
    %v158 = vld [vmem:[#allocation5 + $0xf4] sm:$0xf]
    %v159 = vld [vmem:[#allocation5 + $0xf8] sm:$0xf]
    %v160 = vld [vmem:[#allocation5 + $0xfc] sm:$0xf]
    %v161 = vld [vmem:[#allocation5 + $0x100] sm:$0xf]
    %v162 = vld [vmem:[#allocation5 + $0x104] sm:$0xf]
    %v163 = vld [vmem:[#allocation5 + $0x108] sm:$0xf]
    %v164 = vld [vmem:[#allocation5 + $0x10c] sm:$0xf]
    %v165 = vld [vmem:[#allocation5 + $0x110] sm:$0xf]
    %v166 = vld [vmem:[#allocation5 + $0x114] sm:$0xf]
    %v167 = vld [vmem:[#allocation5 + $0x118] sm:$0xf]
    %v168 = vld [vmem:[#allocation5 + $0x11c] sm:$0xf]
    %v169 = vld [vmem:[#allocation5 + $0x120] sm:$0xf]
    %v170 = vld [vmem:[#allocation5 + $0x124] sm:$0xf]
    %v171 = vld [vmem:[#allocation5 + $0x128] sm:$0xf]
    %v172 = vld [vmem:[#allocation5 + $0x12c] sm:$0xf]
    %v173 = vld [vmem:[#allocation5 + $0x130] sm:$0xf]
    %v174 = vld [vmem:[#allocation5 + $0x134] sm:$0xf]
    %v175 = vld [vmem:[#allocation5 + $0x138] sm:$0xf]
    %v176 = vld [vmem:[#allocation5 + $0x13c] sm:$0xf]
    %v177 = vld [vmem:[#allocation5 + $0x140] sm:$0xf]
    %v178 = vld [vmem:[#allocation5 + $0x144] sm:$0xf]
    %v179 = vld [vmem:[#allocation5 + $0x148] sm:$0xf]
    %v180 = vld [vmem:[#allocation5 + $0x14c] sm:$0xf]
    %v181 = vld [vmem:[#allocation5 + $0x150] sm:$0xf]
    %v182 = vld [vmem:[#allocation5 + $0x154] sm:$0xf]
    %v183 = vld [vmem:[#allocation5 + $0x158] sm:$0xf]
    %v184 = vld [vmem:[#allocation5 + $0x15c] sm:$0xf]
    %v185 = vld [vmem:[#allocation5 + $0x160] sm:$0xf]
    %v186 = vld [vmem:[#allocation5 + $0x164] sm:$0xf]
    %v187 = vld [vmem:[#allocation5 + $0x168] sm:$0xf]
    %v188 = vld [vmem:[#allocation5 + $0x16c] sm:$0xf]
    %v189 = vld [vmem:[#allocation5 + $0x170] sm:$0xf]
    %v190 = vld [vmem:[#allocation5 + $0x174] sm:$0xf]
    %v191 = vld [vmem:[#allocation5 + $0x178] sm:$0xf]
    %v192 = vld [vmem:[#allocation5 + $0x17c] sm:$0xf]
    %v193 = vld [vmem:[#allocation5 + $0x180] sm:$0xf]
    %v194 = vld [vmem:[#allocation5 + $0x184] sm:$0xf]
    %v195 = vld [vmem:[#allocation5 + $0x188] sm:$0xf]
    %v196 = vld [vmem:[#allocation5 + $0x18c] sm:$0xf]
    %v197 = vld [vmem:[#allocation5 + $0x190] sm:$0xf]
    %v198 = vld [vmem:[#allocation5 + $0x194] sm:$0xf]
    %v199 = vld [vmem:[#allocation5 + $0x198] sm:$0xf]
    %v200 = vld [vmem:[#allocation5 + $0x19c] sm:$0xf]
    %v201 = vld [vmem:[#allocation5 + $0x1a0] sm:$0xf]
    %v202 = vld [vmem:[#allocation5 + $0x1a4] sm:$0xf]
    %v203 = vld [vmem:[#allocation5 + $0x1a8] sm:$0xf]
    %v204 = vld [vmem:[#allocation5 + $0x1ac] sm:$0xf]
    %v205 = vld [vmem:[#allocation5 + $0x1b0] sm:$0xf]
    %v206 = vld [vmem:[#allocation5 + $0x1b4] sm:$0xf]
    %v207 = vld [vmem:[#allocation5 + $0x1b8] sm:$0xf]
    %v208 = vld [vmem:[#allocation5 + $0x1bc] sm:$0xf]
    %v209 = vld [vmem:[#allocation5 + $0x1c0] sm:$0xf]
    %v210 = vld [vmem:[#allocation5 + $0x1c4] sm:$0xf]
    %v211 = vld [vmem:[#allocation5 + $0x1c8] sm:$0xf]
    %v212 = vld [vmem:[#allocation5 + $0x1cc] sm:$0xf]
    %v213 = vld [vmem:[#allocation5 + $0x1d0] sm:$0xf]
    %v214 = vld [vmem:[#allocation5 + $0x1d4] sm:$0xf]
    %v215 = vld [vmem:[#allocation5 + $0x1d8] sm:$0xf]
    %v216 = vld [vmem:[#allocation5 + $0x1dc] sm:$0xf]
    %v217 = vld [vmem:[#allocation5 + $0x1e0] sm:$0xf]
    %v218 = vld [vmem:[#allocation5 + $0x1e4] sm:$0xf]
    %v219 = vld [vmem:[#allocation5 + $0x1e8] sm:$0xf]
    %v220 = vld [vmem:[#allocation5 + $0x1ec] sm:$0xf]
    %v221 = vld [vmem:[#allocation5 + $0x1f0] sm:$0xf]
    %v222 = vld [vmem:[#allocation5 + $0x1f4] sm:$0xf]
    %v223 = vld [vmem:[#allocation5 + $0x1f8] sm:$0xf]
    %v224 = vld [vmem:[#allocation5 + $0x1fc] sm:$0xf]
    %v225 = vld [vmem:[%s2] sm:$0x1]
    %v227 = vlaneseq
    %v228 = vshrl.u32 %v227, 7
    %v229 = vsub.s32 0, %v228
    %v230 = vrot.slane %v225, %v229
    %v360 = vunpack.c.l.b16 %v97
    %v361 = vunpack.c.l.b16 %v98
    %v362 = vunpack.c.l.b16 %v99
    %v363 = vunpack.c.l.b16 %v100
    %v364 = vunpack.c.l.b16 %v101
    %v365 = vunpack.c.l.b16 %v102
    %v366 = vunpack.c.l.b16 %v103
    %v367 = vunpack.c.l.b16 %v104
    %v368 = vunpack.c.l.b16 %v105
    %v369 = vunpack.c.l.b16 %v106
    %v370 = vunpack.c.l.b16 %v107
    %v371 = vunpack.c.l.b16 %v108
    %v372 = vunpack.c.l.b16 %v109
    %v373 = vunpack.c.l.b16 %v110
    %v374 = vunpack.c.l.b16 %v111
    %v375 = vunpack.c.l.b16 %v112
    %v376 = vunpack.c.l.b16 %v113
    %v377 = vunpack.c.l.b16 %v114
    %v378 = vunpack.c.l.b16 %v115
    %v379 = vunpack.c.l.b16 %v116
    %v380 = vunpack.c.l.b16 %v117
    %v381 = vunpack.c.l.b16 %v118
    %v382 = vunpack.c.l.b16 %v119
    %v383 = vunpack.c.l.b16 %v120
    %v384 = vunpack.c.l.b16 %v121
    %v385 = vunpack.c.l.b16 %v122
    %v386 = vunpack.c.l.b16 %v123
    %v387 = vunpack.c.l.b16 %v124
    %v388 = vunpack.c.l.b16 %v125
    %v389 = vunpack.c.l.b16 %v126
    %v390 = vunpack.c.l.b16 %v127
    %v391 = vunpack.c.l.b16 %v128
    %v392 = vunpack.c.l.b16 %v129
    %v393 = vunpack.c.l.b16 %v130
    %v394 = vunpack.c.l.b16 %v131
    %v395 = vunpack.c.l.b16 %v132
    %v396 = vunpack.c.l.b16 %v133
    %v397 = vunpack.c.l.b16 %v134
    %v398 = vunpack.c.l.b16 %v135
    %v399 = vunpack.c.l.b16 %v136
    %v400 = vunpack.c.l.b16 %v137
    %v401 = vunpack.c.l.b16 %v138
    %v402 = vunpack.c.l.b16 %v139
    %v403 = vunpack.c.l.b16 %v140
    %v404 = vunpack.c.l.b16 %v141
    %v405 = vunpack.c.l.b16 %v142
    %v406 = vunpack.c.l.b16 %v143
    %v407 = vunpack.c.l.b16 %v144
    %v408 = vunpack.c.l.b16 %v145
    %v409 = vunpack.c.l.b16 %v146
    %v410 = vunpack.c.l.b16 %v147
    %v411 = vunpack.c.l.b16 %v148
    %v412 = vunpack.c.l.b16 %v149
    %v413 = vunpack.c.l.b16 %v150
    %v414 = vunpack.c.l.b16 %v151
    %v415 = vunpack.c.l.b16 %v152
    %v416 = vunpack.c.l.b16 %v153
    %v417 = vunpack.c.l.b16 %v154
    %v418 = vunpack.c.l.b16 %v155
    %v419 = vunpack.c.l.b16 %v156
    %v420 = vunpack.c.l.b16 %v157
    %v421 = vunpack.c.l.b16 %v158
    %v422 = vunpack.c.l.b16 %v159
    %v423 = vunpack.c.l.b16 %v160
    %v424 = vunpack.c.l.b16 %v161
    %v425 = vunpack.c.l.b16 %v162
    %v426 = vunpack.c.l.b16 %v163
    %v427 = vunpack.c.l.b16 %v164
    %v428 = vunpack.c.l.b16 %v165
    %v429 = vunpack.c.l.b16 %v166
    %v430 = vunpack.c.l.b16 %v167
    %v431 = vunpack.c.l.b16 %v168
    %v432 = vunpack.c.l.b16 %v169
    %v433 = vunpack.c.l.b16 %v170
    %v434 = vunpack.c.l.b16 %v171
    %v435 = vunpack.c.l.b16 %v172
    %v436 = vunpack.c.l.b16 %v173
    %v437 = vunpack.c.l.b16 %v174
    %v438 = vunpack.c.l.b16 %v175
    %v439 = vunpack.c.l.b16 %v176
    %v440 = vunpack.c.l.b16 %v177
    %v441 = vunpack.c.l.b16 %v178
    %v442 = vunpack.c.l.b16 %v179
    %v443 = vunpack.c.l.b16 %v180
    %v444 = vunpack.c.l.b16 %v181
    %v445 = vunpack.c.l.b16 %v182
    %v446 = vunpack.c.l.b16 %v183
    %v447 = vunpack.c.l.b16 %v184
    %v448 = vunpack.c.l.b16 %v185
    %v449 = vunpack.c.l.b16 %v186
    %v450 = vunpack.c.l.b16 %v187
    %v451 = vunpack.c.l.b16 %v188
    %v452 = vunpack.c.l.b16 %v189
    %v453 = vunpack.c.l.b16 %v190
    %v454 = vunpack.c.l.b16 %v191
    %v455 = vunpack.c.l.b16 %v192
    %v456 = vunpack.c.l.b16 %v193
    %v457 = vunpack.c.l.b16 %v194
    %v458 = vunpack.c.l.b16 %v195
    %v459 = vunpack.c.l.b16 %v196
    %v460 = vunpack.c.l.b16 %v197
    %v461 = vunpack.c.l.b16 %v198
    %v462 = vunpack.c.l.b16 %v199
    %v463 = vunpack.c.l.b16 %v200
    %v464 = vunpack.c.l.b16 %v201
    %v465 = vunpack.c.l.b16 %v202
    %v466 = vunpack.c.l.b16 %v203
    %v467 = vunpack.c.l.b16 %v204
    %v468 = vunpack.c.l.b16 %v205
    %v469 = vunpack.c.l.b16 %v206
    %v470 = vunpack.c.l.b16 %v207
    %v471 = vunpack.c.l.b16 %v208
    %v472 = vunpack.c.l.b16 %v209
    %v473 = vunpack.c.l.b16 %v210
    %v474 = vunpack.c.l.b16 %v211
    %v475 = vunpack.c.l.b16 %v212
    %v476 = vunpack.c.l.b16 %v213
    %v477 = vunpack.c.l.b16 %v214
    %v478 = vunpack.c.l.b16 %v215
    %v479 = vunpack.c.l.b16 %v216
    %v480 = vunpack.c.l.b16 %v217
    %v481 = vunpack.c.l.b16 %v218
    %v482 = vunpack.c.l.b16 %v219
    %v483 = vunpack.c.l.b16 %v220
    %v484 = vunpack.c.l.b16 %v221
    %v485 = vunpack.c.l.b16 %v222
    %v486 = vunpack.c.l.b16 %v223
    %v487 = vunpack.c.l.b16 %v224
    %v488 = vpack.c.b16 %v361, %v360
    %v489 = vpack.c.b16 %v363, %v362
    %v490 = vpack.c.b16 %v365, %v364
    %v491 = vpack.c.b16 %v367, %v366
    %v492 = vpack.c.b16 %v369, %v368
    %v493 = vpack.c.b16 %v371, %v370
    %v494 = vpack.c.b16 %v373, %v372
    %v495 = vpack.c.b16 %v375, %v374
    %v496 = vpack.c.b16 %v377, %v376
    %v497 = vpack.c.b16 %v379, %v378
    %v498 = vpack.c.b16 %v381, %v380
    %v499 = vpack.c.b16 %v383, %v382
    %v500 = vpack.c.b16 %v385, %v384
    %v501 = vpack.c.b16 %v387, %v386
    %v502 = vpack.c.b16 %v389, %v388
    %v503 = vpack.c.b16 %v391, %v390
    %v504 = vpack.c.b16 %v393, %v392
    %v505 = vpack.c.b16 %v395, %v394
    %v506 = vpack.c.b16 %v397, %v396
    %v507 = vpack.c.b16 %v399, %v398
    %v508 = vpack.c.b16 %v401, %v400
    %v509 = vpack.c.b16 %v403, %v402
    %v510 = vpack.c.b16 %v405, %v404
    %v511 = vpack.c.b16 %v407, %v406
    %v512 = vpack.c.b16 %v409, %v408
    %v513 = vpack.c.b16 %v411, %v410
    %v514 = vpack.c.b16 %v413, %v412
    %v515 = vpack.c.b16 %v415, %v414
    %v516 = vpack.c.b16 %v417, %v416
    %v517 = vpack.c.b16 %v419, %v418
    %v518 = vpack.c.b16 %v421, %v420
    %v519 = vpack.c.b16 %v423, %v422
    %v520 = vpack.c.b16 %v425, %v424
    %v521 = vpack.c.b16 %v427, %v426
    %v522 = vpack.c.b16 %v429, %v428
    %v523 = vpack.c.b16 %v431, %v430
    %v524 = vpack.c.b16 %v433, %v432
    %v525 = vpack.c.b16 %v435, %v434
    %v526 = vpack.c.b16 %v437, %v436
    %v527 = vpack.c.b16 %v439, %v438
    %v528 = vpack.c.b16 %v441, %v440
    %v529 = vpack.c.b16 %v443, %v442
    %v530 = vpack.c.b16 %v445, %v444
    %v531 = vpack.c.b16 %v447, %v446
    %v532 = vpack.c.b16 %v449, %v448
    %v533 = vpack.c.b16 %v451, %v450
    %v534 = vpack.c.b16 %v453, %v452
    %v535 = vpack.c.b16 %v455, %v454
    %v536 = vpack.c.b16 %v457, %v456
    %v537 = vpack.c.b16 %v459, %v458
    %v538 = vpack.c.b16 %v461, %v460
    %v539 = vpack.c.b16 %v463, %v462
    %v540 = vpack.c.b16 %v465, %v464
    %v541 = vpack.c.b16 %v467, %v466
    %v542 = vpack.c.b16 %v469, %v468
    %v543 = vpack.c.b16 %v471, %v470
    %v544 = vpack.c.b16 %v473, %v472
    %v545 = vpack.c.b16 %v475, %v474
    %v546 = vpack.c.b16 %v477, %v476
    %v547 = vpack.c.b16 %v479, %v478
    %v548 = vpack.c.b16 %v481, %v480
    %v549 = vpack.c.b16 %v483, %v482
    %v550 = vpack.c.b16 %v485, %v484
    %v551 = vpack.c.b16 %v487, %v486
    %616 = vmatprep.subr.bf16.mxu0 0
    %617 = vmatpush1.bf16.msra.mxu0 %v495
    %618 = vmatprep.subr.bf16.mxu0 0
    %619 = vmatpush1.bf16.msra.mxu0 %v494
    %620 = vmatprep.subr.bf16.mxu0 0
    %621 = vmatpush1.bf16.msra.mxu0 %v493
    %622 = vmatprep.subr.bf16.mxu0 0
    %623 = vmatpush1.bf16.msra.mxu0 %v492
    %624 = vmatprep.subr.bf16.mxu0 0
    %625 = vmatpush1.bf16.msra.mxu0 %v491
    %626 = vmatprep.subr.bf16.mxu0 0
    %627 = vmatpush1.bf16.msra.mxu0 %v490
    %628 = vmatprep.subr.bf16.mxu0 0
    %629 = vmatpush1.bf16.msra.mxu0 %v489
    %630 = vmatprep.subr.bf16.mxu0 0
    %631 = vmatpush1.bf16.msra.mxu0 %v488
    %632 = vmatprep.subr.bf16.mxu0 0
    %633 = vmatpush2.bf16.msra.mxu0 %v503
    %634 = vmatprep.subr.bf16.mxu0 0
    %635 = vmatpush2.bf16.msra.mxu0 %v502
    %636 = vmatprep.subr.bf16.mxu0 0
    %637 = vmatpush2.bf16.msra.mxu0 %v501
    %638 = vmatprep.subr.bf16.mxu0 0
    %639 = vmatpush2.bf16.msra.mxu0 %v500
    %640 = vmatprep.subr.bf16.mxu0 0
    %641 = vmatpush2.bf16.msra.mxu0 %v499
    %642 = vmatprep.subr.bf16.mxu0 0
    %643 = vmatpush2.bf16.msra.mxu0 %v498
    %644 = vmatprep.subr.bf16.mxu0 0
    %645 = vmatpush2.bf16.msra.mxu0 %v497
    %646 = vmatprep.subr.bf16.mxu0 0
    %647 = vmatpush2.bf16.msra.mxu0 %v496
    %648 = vmatprep.mubr.bf16.mxu0 %v90
    %649 = vmatmul.mubr.bf16.gmra.mxu0 %v89
    %v650 = vpop.f32.mrf.mxu0
    %v651 = vadd.f32 %v230, %v650
    %v652 = vpop.f32.mrf.mxu0
    %v653 = vpop.f32.mrf.mxu0
    %v654 = vpop.f32.mrf.mxu0
    %655 = vdwg.mxu0
    %656 = vmatprep.subr.bf16.mxu0 0
    %657 = vmatpush1.bf16.msra.mxu0 %v511
    %658 = vmatprep.subr.bf16.mxu0 0
    %659 = vmatpush1.bf16.msra.mxu0 %v510
    %660 = vmatprep.subr.bf16.mxu0 0
    %661 = vmatpush1.bf16.msra.mxu0 %v509
    %662 = vmatprep.subr.bf16.mxu0 0
    %663 = vmatpush1.bf16.msra.mxu0 %v508
    %664 = vmatprep.subr.bf16.mxu0 0
    %665 = vmatpush1.bf16.msra.mxu0 %v507
    %666 = vmatprep.subr.bf16.mxu0 0
    %667 = vmatpush1.bf16.msra.mxu0 %v506
    %668 = vmatprep.subr.bf16.mxu0 0
    %669 = vmatpush1.bf16.msra.mxu0 %v505
    %670 = vmatprep.subr.bf16.mxu0 0
    %671 = vmatpush1.bf16.msra.mxu0 %v504
    %672 = vmatprep.subr.bf16.mxu0 0
    %673 = vmatpush2.bf16.msra.mxu0 %v519
    %674 = vmatprep.subr.bf16.mxu0 0
    %675 = vmatpush2.bf16.msra.mxu0 %v518
    %676 = vmatprep.subr.bf16.mxu0 0
    %677 = vmatpush2.bf16.msra.mxu0 %v517
    %678 = vmatprep.subr.bf16.mxu0 0
    %679 = vmatpush2.bf16.msra.mxu0 %v516
    %680 = vmatprep.subr.bf16.mxu0 0
    %681 = vmatpush2.bf16.msra.mxu0 %v515
    %682 = vmatprep.subr.bf16.mxu0 0
    %683 = vmatpush2.bf16.msra.mxu0 %v514
    %684 = vmatprep.subr.bf16.mxu0 0
    %685 = vmatpush2.bf16.msra.mxu0 %v513
    %686 = vmatprep.subr.bf16.mxu0 0
    %687 = vmatpush2.bf16.msra.mxu0 %v512
    %688 = vmatprep.mubr.bf16.mxu0 %v92
    %689 = vmatmul.mubr.bf16.gmra.mxu0 %v91
    %v690 = vpop.f32.mrf.mxu0
    %v691 = vadd.f32 %v651, %v690
    %v692 = vpop.f32.mrf.mxu0
    %v693 = vpop.f32.mrf.mxu0
    %v694 = vpop.f32.mrf.mxu0
    %695 = vdwg.mxu0
    %696 = vmatprep.subr.bf16.mxu0 0
    %697 = vmatpush1.bf16.msra.mxu0 %v527
    %698 = vmatprep.subr.bf16.mxu0 0
    %699 = vmatpush1.bf16.msra.mxu0 %v526
    %700 = vmatprep.subr.bf16.mxu0 0
    %701 = vmatpush1.bf16.msra.mxu0 %v525
    %702 = vmatprep.subr.bf16.mxu0 0
    %703 = vmatpush1.bf16.msra.mxu0 %v524
    %704 = vmatprep.subr.bf16.mxu0 0
    %705 = vmatpush1.bf16.msra.mxu0 %v523
    %706 = vmatprep.subr.bf16.mxu0 0
    %707 = vmatpush1.bf16.msra.mxu0 %v522
    %708 = vmatprep.subr.bf16.mxu0 0
    %709 = vmatpush1.bf16.msra.mxu0 %v521
    %710 = vmatprep.subr.bf16.mxu0 0
    %711 = vmatpush1.bf16.msra.mxu0 %v520
    %712 = vmatprep.subr.bf16.mxu0 0
    %713 = vmatpush2.bf16.msra.mxu0 %v535
    %714 = vmatprep.subr.bf16.mxu0 0
    %715 = vmatpush2.bf16.msra.mxu0 %v534
    %716 = vmatprep.subr.bf16.mxu0 0
    %717 = vmatpush2.bf16.msra.mxu0 %v533
    %718 = vmatprep.subr.bf16.mxu0 0
    %719 = vmatpush2.bf16.msra.mxu0 %v532
    %720 = vmatprep.subr.bf16.mxu0 0
    %721 = vmatpush2.bf16.msra.mxu0 %v531
    %722 = vmatprep.subr.bf16.mxu0 0
    %723 = vmatpush2.bf16.msra.mxu0 %v530
    %724 = vmatprep.subr.bf16.mxu0 0
    %725 = vmatpush2.bf16.msra.mxu0 %v529
    %726 = vmatprep.subr.bf16.mxu0 0
    %727 = vmatpush2.bf16.msra.mxu0 %v528
    %728 = vmatprep.mubr.bf16.mxu0 %v94
    %729 = vmatmul.mubr.bf16.gmra.mxu0 %v93
    %v730 = vpop.f32.mrf.mxu0
    %v731 = vadd.f32 %v691, %v730
    %v732 = vpop.f32.mrf.mxu0
    %v733 = vpop.f32.mrf.mxu0
    %v734 = vpop.f32.mrf.mxu0
    %735 = vdwg.mxu0
    %736 = vmatprep.subr.bf16.mxu0 0
    %737 = vmatpush1.bf16.msra.mxu0 %v543
    %738 = vmatprep.subr.bf16.mxu0 0
    %739 = vmatpush1.bf16.msra.mxu0 %v542
    %740 = vmatprep.subr.bf16.mxu0 0
    %741 = vmatpush1.bf16.msra.mxu0 %v541
    %742 = vmatprep.subr.bf16.mxu0 0
    %743 = vmatpush1.bf16.msra.mxu0 %v540
    %744 = vmatprep.subr.bf16.mxu0 0
    %745 = vmatpush1.bf16.msra.mxu0 %v539
    %746 = vmatprep.subr.bf16.mxu0 0
    %747 = vmatpush1.bf16.msra.mxu0 %v538
    %748 = vmatprep.subr.bf16.mxu0 0
    %749 = vmatpush1.bf16.msra.mxu0 %v537
    %750 = vmatprep.subr.bf16.mxu0 0
    %751 = vmatpush1.bf16.msra.mxu0 %v536
    %752 = vmatprep.subr.bf16.mxu0 0
    %753 = vmatpush2.bf16.msra.mxu0 %v551
    %754 = vmatprep.subr.bf16.mxu0 0
    %755 = vmatpush2.bf16.msra.mxu0 %v550
    %756 = vmatprep.subr.bf16.mxu0 0
    %757 = vmatpush2.bf16.msra.mxu0 %v549
    %758 = vmatprep.subr.bf16.mxu0 0
    %759 = vmatpush2.bf16.msra.mxu0 %v548
    %760 = vmatprep.subr.bf16.mxu0 0
    %761 = vmatpush2.bf16.msra.mxu0 %v547
    %762 = vmatprep.subr.bf16.mxu0 0
    %763 = vmatpush2.bf16.msra.mxu0 %v546
    %764 = vmatprep.subr.bf16.mxu0 0
    %765 = vmatpush2.bf16.msra.mxu0 %v545
    %766 = vmatprep.subr.bf16.mxu0 0
    %767 = vmatpush2.bf16.msra.mxu0 %v544
    %768 = vmatprep.mubr.bf16.mxu0 %v96
    %769 = vmatmul.mubr.bf16.gmra.mxu0 %v95
    %v770 = vpop.f32.mrf.mxu0
    %v771 = vadd.f32 %v731, %v770
    %v772 = vpop.f32.mrf.mxu0
    %v773 = vpop.f32.mrf.mxu0
    %v774 = vpop.f32.mrf.mxu0
    %775 = vdwg.mxu0
    %v776 = vmax.f32 %v771, 0.0
    %v777 = vpack.c.bf16 %v776, %v776
    %v778 = vld [vmem:[#allocation7] sm:$0xf]
    %v779 = vld [vmem:[#allocation7 + $0x4] sm:$0xf]
    %v780 = vld [vmem:[#allocation7 + $0x8] sm:$0xf]
    %v781 = vld [vmem:[#allocation7 + $0xc] sm:$0xf]
    %v782 = vld [vmem:[#allocation7 + $0x10] sm:$0xf]
    %v783 = vld [vmem:[#allocation7 + $0x14] sm:$0xf]
    %v784 = vld [vmem:[#allocation7 + $0x18] sm:$0xf]
    %v785 = vld [vmem:[#allocation7 + $0x1c] sm:$0xf]
    %v786 = vld [vmem:[#allocation7 + $0x20] sm:$0xf]
    %v787 = vld [vmem:[#allocation7 + $0x24] sm:$0xf]
    %v788 = vld [vmem:[#allocation7 + $0x28] sm:$0xf]
    %v789 = vld [vmem:[#allocation7 + $0x2c] sm:$0xf]
    %v790 = vld [vmem:[#allocation7 + $0x30] sm:$0xf]
    %v791 = vld [vmem:[#allocation7 + $0x34] sm:$0xf]
    %v792 = vld [vmem:[#allocation7 + $0x38] sm:$0xf]
    %v793 = vld [vmem:[#allocation7 + $0x3c] sm:$0xf]
    %v794 = vld [vmem:[%s4] sm:$0x1]
    %v796 = vlaneseq
    %v797 = vshrl.u32 %v796, 7
    %v798 = vsub.s32 0, %v797
    %v799 = vrot.slane %v794, %v798
    %v817 = vunpack.c.l.b16 %v778
    %v818 = vunpack.c.l.b16 %v779
    %v819 = vunpack.c.l.b16 %v780
    %v820 = vunpack.c.l.b16 %v781
    %v821 = vunpack.c.l.b16 %v782
    %v822 = vunpack.c.l.b16 %v783
    %v823 = vunpack.c.l.b16 %v784
    %v824 = vunpack.c.l.b16 %v785
    %v825 = vunpack.c.l.b16 %v786
    %v826 = vunpack.c.l.b16 %v787
    %v827 = vunpack.c.l.b16 %v788
    %v828 = vunpack.c.l.b16 %v789
    %v829 = vunpack.c.l.b16 %v790
    %v830 = vunpack.c.l.b16 %v791
    %v831 = vunpack.c.l.b16 %v792
    %v832 = vunpack.c.l.b16 %v793
    %v833 = vpack.c.b16 %v818, %v817
    %v834 = vpack.c.b16 %v820, %v819
    %v835 = vpack.c.b16 %v822, %v821
    %v836 = vpack.c.b16 %v824, %v823
    %v837 = vpack.c.b16 %v826, %v825
    %v838 = vpack.c.b16 %v828, %v827
    %v839 = vpack.c.b16 %v830, %v829
    %v840 = vpack.c.b16 %v832, %v831
    %849 = vmatprep.subr.bf16.mxu0 0
    %850 = vmatpush1.bf16.msra.mxu0 %v840
    %851 = vmatprep.subr.bf16.mxu0 0
    %852 = vmatpush1.bf16.msra.mxu0 %v839
    %853 = vmatprep.subr.bf16.mxu0 0
    %854 = vmatpush1.bf16.msra.mxu0 %v838
    %855 = vmatprep.subr.bf16.mxu0 0
    %856 = vmatpush1.bf16.msra.mxu0 %v837
    %857 = vmatprep.subr.bf16.mxu0 0
    %858 = vmatpush1.bf16.msra.mxu0 %v836
    %859 = vmatprep.subr.bf16.mxu0 0
    %860 = vmatpush1.bf16.msra.mxu0 %v835
    %861 = vmatprep.subr.bf16.mxu0 0
    %862 = vmatpush1.bf16.msra.mxu0 %v834
    %863 = vmatprep.subr.bf16.mxu0 0
    %864 = vmatpush1.bf16.msra.mxu0 %v833
    %865 = vmatprep.subr.bf16.mxu0 0
    %866 = vmatpush2.bf16.msra.mxu0 0
    %867 = vmatprep.subr.bf16.mxu0 0
    %868 = vmatpush2.bf16.msra.mxu0 0
    %869 = vmatprep.subr.bf16.mxu0 0
    %870 = vmatpush2.bf16.msra.mxu0 0
    %871 = vmatprep.subr.bf16.mxu0 0
    %872 = vmatpush2.bf16.msra.mxu0 0
    %873 = vmatprep.subr.bf16.mxu0 0
    %874 = vmatpush2.bf16.msra.mxu0 0
    %875 = vmatprep.subr.bf16.mxu0 0
    %876 = vmatpush2.bf16.msra.mxu0 0
    %877 = vmatprep.subr.bf16.mxu0 0
    %878 = vmatpush2.bf16.msra.mxu0 0
    %879 = vmatprep.subr.bf16.mxu0 0
    %880 = vmatpush2.bf16.msra.mxu0 0
    %881 = vmatprep.mubr.bf16.mxu0 0
    %882 = vmatmul.mubr.bf16.gmra.mxu0 %v777
    %v883 = vpop.f32.mrf.mxu0
    %v884 = vadd.f32 %v799, %v883
    %v885 = vpop.f32.mrf.mxu0
    %v886 = vpop.f32.mrf.mxu0
    %v887 = vpop.f32.mrf.mxu0
    %888 = vdwg.mxu0
    %v889 = vmax.f32 %v884, 0.0
    %v890 = vpack.c.bf16 %v889, %v889
    %v891 = vld [vmem:[#allocation8] sm:$0xf]
    %v892 = vld [vmem:[#allocation8 + $0x4] sm:$0xf]
    %v893 = vld [vmem:[#allocation8 + $0x8] sm:$0xf]
    %v894 = vld [vmem:[#allocation8 + $0xc] sm:$0xf]
    %v895 = vld [vmem:[#allocation8 + $0x10] sm:$0xf]
    %v896 = vld [vmem:[#allocation8 + $0x14] sm:$0xf]
    %v897 = vld [vmem:[#allocation8 + $0x18] sm:$0xf]
    %v898 = vld [vmem:[#allocation8 + $0x1c] sm:$0xf]
    %v899 = vld [vmem:[#allocation8 + $0x20] sm:$0xf]
    %v900 = vld [vmem:[#allocation8 + $0x24] sm:$0xf]
    %v901 = vld [vmem:[#allocation8 + $0x28] sm:$0xf]
    %v902 = vld [vmem:[#allocation8 + $0x2c] sm:$0xf]
    %v903 = vld [vmem:[#allocation8 + $0x30] sm:$0xf]
    %v904 = vld [vmem:[#allocation8 + $0x34] sm:$0xf]
    %v905 = vld [vmem:[#allocation8 + $0x38] sm:$0xf]
    %v906 = vld [vmem:[#allocation8 + $0x3c] sm:$0xf]
    %v907 = vld [vmem:[%s6] sm:$0x1]
    %v909 = vlaneseq
    %v910 = vshrl.u32 %v909, 7
    %v911 = vsub.s32 0, %v910
    %v912 = vrot.slane %v907, %v911
    %v930 = vunpack.c.l.b16 %v891
    %v931 = vunpack.c.l.b16 %v892
    %v932 = vunpack.c.l.b16 %v893
    %v933 = vunpack.c.l.b16 %v894
    %v934 = vunpack.c.l.b16 %v895
    %v935 = vunpack.c.l.b16 %v896
    %v936 = vunpack.c.l.b16 %v897
    %v937 = vunpack.c.l.b16 %v898
    %v938 = vunpack.c.l.b16 %v899
    %v939 = vunpack.c.l.b16 %v900
    %v940 = vunpack.c.l.b16 %v901
    %v941 = vunpack.c.l.b16 %v902
    %v942 = vunpack.c.l.b16 %v903
    %v943 = vunpack.c.l.b16 %v904
    %v944 = vunpack.c.l.b16 %v905
    %v945 = vunpack.c.l.b16 %v906
    %v946 = vpack.c.b16 %v931, %v930
    %v947 = vpack.c.b16 %v933, %v932
    %v948 = vpack.c.b16 %v935, %v934
    %v949 = vpack.c.b16 %v937, %v936
    %v950 = vpack.c.b16 %v939, %v938
    %v951 = vpack.c.b16 %v941, %v940
    %v952 = vpack.c.b16 %v943, %v942
    %v953 = vpack.c.b16 %v945, %v944
    %962 = vmatprep.subr.bf16.mxu0 0
    %963 = vmatpush1.bf16.msra.mxu0 %v953
    %964 = vmatprep.subr.bf16.mxu0 0
    %965 = vmatpush1.bf16.msra.mxu0 %v952
    %966 = vmatprep.subr.bf16.mxu0 0
    %967 = vmatpush1.bf16.msra.mxu0 %v951
    %968 = vmatprep.subr.bf16.mxu0 0
    %969 = vmatpush1.bf16.msra.mxu0 %v950
    %970 = vmatprep.subr.bf16.mxu0 0
    %971 = vmatpush1.bf16.msra.mxu0 %v949
    %972 = vmatprep.subr.bf16.mxu0 0
    %973 = vmatpush1.bf16.msra.mxu0 %v948
    %974 = vmatprep.subr.bf16.mxu0 0
    %975 = vmatpush1.bf16.msra.mxu0 %v947
    %976 = vmatprep.subr.bf16.mxu0 0
    %977 = vmatpush1.bf16.msra.mxu0 %v946
    %978 = vmatprep.subr.bf16.mxu0 0
    %979 = vmatpush2.bf16.msra.mxu0 0
    %980 = vmatprep.subr.bf16.mxu0 0
    %981 = vmatpush2.bf16.msra.mxu0 0
    %982 = vmatprep.subr.bf16.mxu0 0
    %983 = vmatpush2.bf16.msra.mxu0 0
    %984 = vmatprep.subr.bf16.mxu0 0
    %985 = vmatpush2.bf16.msra.mxu0 0
    %986 = vmatprep.subr.bf16.mxu0 0
    %987 = vmatpush2.bf16.msra.mxu0 0
    %988 = vmatprep.subr.bf16.mxu0 0
    %989 = vmatpush2.bf16.msra.mxu0 0
    %990 = vmatprep.subr.bf16.mxu0 0
    %991 = vmatpush2.bf16.msra.mxu0 0
    %992 = vmatprep.subr.bf16.mxu0 0
    %993 = vmatpush2.bf16.msra.mxu0 0
    %994 = vmatprep.mubr.bf16.mxu0 0
    %995 = vmatmul.mubr.bf16.gmra.mxu0 %v890
    %v996 = vpop.f32.mrf.mxu0
    %v997 = vadd.f32 %v912, %v996
    %v998 = vpop.f32.mrf.mxu0
    %v999 = vpop.f32.mrf.mxu0
    %v1000 = vpop.f32.mrf.mxu0
    %1001 = vdwg.mxu0
    %1002 = vst [vmem:[#allocation10] sm:$0xff] %v997
    // Predicated region
    $region46: #{tpu_custom_call.1} parent=1 // pred_check
      _
    $region47: #{tpu_custom_call.1} parent=1 // pred_check_branch
      %1004 = sbr.rel (0) target = $region49
    $region48: #{tpu_custom_call.1} parent=1 // pred_region
      %s1006 = ssub.s32 128, 128
      %1007 = vsyncadd [#allocation4], %s1006
      %s1009 = sshll.u32 [#allocation10], 4
      %s1010 = int_to_ptr.vmem [resolvable:$true] %s1009
      %1012 = dma.vmem_to_hbm [thread:$0]  %s1010, 128, %s7, [#allocation4]
    $region49: #{tpu_custom_call.1} parent=1 // pred_fallthru
      _
    // Predicated region
    $region50: #{tpu_custom_call.1} parent=1 // pred_check
      _
    $region51: #{tpu_custom_call.1} parent=1 // pred_check_branch
      %1014 = sbr.rel (0) target = $region53
    $region52: #{tpu_custom_call.1} parent=1 // pred_region
      %1015 = dma.done [#allocation4], 128
    $region53: #{tpu_custom_call.1} parent=1 // pred_fallthru
      _
    %1016 = vsyncpa [#allocation3], 1
    %1017 = vsyncpa [#allocation6], 1
    %1018 = vsyncpa [#allocation9], 1
    %1019 = vsyncpa [#allocation4], 1

</llo_original>
